<compile_context>
chip_gen: v6e
topology: v6e:2x2x1
jax: 0.10.0
libtpu: 0.0.40
codegen_flags: <defaults>
</compile_context>

<pallas_src>
import math
import functools

import jax
import jax.numpy as jnp
from jax import lax
from jax.experimental import pallas as pl
from jax.experimental.pallas import tpu as pltpu

_LOG2 = math.log(2.0)


def _round_up(n, m):
    return ((n + m - 1) // m) * m


def _rbf_covar_kernel(hyp_ref, x1_ref, x2_ref, w1_ref, b1_ref, w2_ref, b2_ref,
                      out_ref, xs_scr, f2_scr):
    """Fused MLP feature pass + scaled-RBF covariance.

    hyp_ref: (2,) f32 SMEM  -> [ -0.5 / lengthscale^2 , outputscale ]
    x1_ref:  [n1p, Fp] f32,  x2_ref: [n2s, Fp] f32
    w1: [Fp, Hp] bf16, b1: [1, Hp] f32, w2: [Hp, Dp] bf16, b2: [1, Dp] f32
    out: [n1p, n2l] f32
    xs_scr: [n1p+n2s, Fp] f32 staging buffer (single MLP pass)
    f2_scr: [n2l, Dp] f32 zero-padded RHS for the lane-dense cross matmul
    """
    n1p = x1_ref.shape[0]
    n2s = x2_ref.shape[0]
    n2l, dp = f2_scr.shape

    cA = (((1,), (0,)), ((), ()))   # contract last(lhs) with first(rhs): A @ B
    cB = (((1,), (1,)), ((), ()))   # contract last with last: A @ B^T (no XLU transpose)

    # --- stage x1/x2 into one buffer -> single MLP feature pass on the MXU ---
    xs_scr[:n1p, :] = x1_ref[...]
    xs_scr[n1p:, :] = x2_ref[...]

    h = lax.dot_general(xs_scr[...].astype(jnp.bfloat16), w1_ref[...], cA,
                        preferred_element_type=jnp.float32) + b1_ref[...]
    h = jnp.maximum(h, 0.0)                                            # ReLU (f32 VPU)
    f = lax.dot_general(h.astype(jnp.bfloat16), w2_ref[...], cA,
                        preferred_element_type=jnp.float32) + b2_ref[...]

    # bf16-round the features ONCE; every term of the squared distance below is
    # computed from these identically-rounded values (f32 accumulation), so the
    # ||a||^2 - 2ab + ||b||^2 cancellation near the diagonal stays exact.
    f1b = f[:n1p].astype(jnp.bfloat16)                                 # [n1p, Dp]
    f2b = f[n1p:].astype(jnp.bfloat16)                                 # [n2s, Dp]

    # f2 goes into a zero-padded [n2l, Dp] scratch: only the cross-matmul RHS /
    # output see the 128-lane padding, not the MLP pass.
    f2_scr[:n2s, :] = f2b.astype(jnp.float32)
    if n2s < n2l:
        f2_scr[n2s:, :] = jnp.zeros((n2l - n2s, dp), jnp.float32)
    f2_full = f2_scr[...]                                              # [n2l, Dp] f32 (bf16-rounded values)

    cross = lax.dot_general(f1b, f2_full.astype(jnp.bfloat16), cB,
                            preferred_element_type=jnp.float32)        # [n1p, n2l]

    f1_32 = f1b.astype(jnp.float32)
    sq1 = jnp.sum(f1_32 * f1_32, axis=-1, keepdims=True)               # [n1p, 1]
    # ||f2||^2 produced directly in lane-major [1, n2l] layout via a tiny M=1
    # MXU dot (compile-proven path; marginal cost at this size).
    ones_row = jnp.ones((1, dp), jnp.float32)
    sq2 = lax.dot_general(ones_row, f2_full * f2_full, cB,
                          preferred_element_type=jnp.float32)          # [1, n2l]

    sq_dist = jnp.maximum(sq1 - 2.0 * cross + sq2, 0.0)

    neg_half_inv_ls2 = hyp_ref[0]      # SMEM scalars: no recompile when hypers train
    outputscale = hyp_ref[1]
    out_ref[...] = outputscale * jnp.exp(neg_half_inv_ls2 * sq_dist)


def prepare_params(params):
    """One-time padding + bf16 casting of the feature-extractor weights.

    Hoisted out of the forward pass: at launch-latency-bound sizes the per-call
    pad/astype XLA ops cost as much as the kernel itself.
    """
    w1, b1, w2, b2 = params
    feat_in, hidden = w1.shape
    d = w2.shape[1]
    fp = _round_up(feat_in, 128)
    hp = _round_up(hidden, 128)
    dp = _round_up(d, 128)
    # Zero padding is numerically inert (zero weight rows/cols, zero bias, ReLU(0)=0).
    w1p = jnp.pad(w1.astype(jnp.float32),
                  ((0, fp - feat_in), (0, hp - hidden))).astype(jnp.bfloat16)
    b1p = jnp.pad(b1.astype(jnp.float32), ((0, 0), (0, hp - hidden)))
    w2p = jnp.pad(w2.astype(jnp.float32),
                  ((0, hp - hidden), (0, dp - d))).astype(jnp.bfloat16)
    b2p = jnp.pad(b2.astype(jnp.float32), ((0, 0), (0, dp - d)))
    return (w1p, b1p, w2p, b2p)


def rbf_module_forward(x1_nchw, x2_nchw, padded_params,
                       lengthscale=_LOG2, outputscale=_LOG2):
    """JAX wrapper: flatten NCHW -> [N, F] (free reshape), pad only if needed, run kernel."""
    w1p, b1p, w2p, b2p = padded_params
    n1 = x1_nchw.shape[0]
    n2 = x2_nchw.shape[0]
    x1 = x1_nchw.reshape(n1, -1)
    x2 = x2_nchw.reshape(n2, -1)
    feat_in = x1.shape[1]

    fp = w1p.shape[0]
    hp = w1p.shape[1]
    dp = w2p.shape[1]

    n1p = _round_up(max(n1, 8), 8)       # sublane pad for x1 rows
    n2s = _round_up(max(n2, 8), 8)       # sublane pad only for the MLP pass
    n2l = _round_up(n2s, 128)            # lane-dense cross-RHS / output columns

    # Pad only when necessary -> zero extra XLA ops at tile-aligned shapes.
    if x1.dtype != jnp.float32:
        x1 = x1.astype(jnp.float32)
    if x2.dtype != jnp.float32:
        x2 = x2.astype(jnp.float32)
    if (n1p, fp) != x1.shape:
        x1 = jnp.pad(x1, ((0, n1p - n1), (0, fp - feat_in)))
    if (n2s, fp) != x2.shape:
        x2 = jnp.pad(x2, ((0, n2s - n2), (0, fp - feat_in)))

    # Hyperparameters as runtime SMEM scalars (trainable without recompiling).
    hyp = jnp.stack([
        jnp.asarray(-0.5 / (lengthscale * lengthscale), jnp.float32),
        jnp.asarray(outputscale, jnp.float32),
    ])

    full = lambda shp: pl.BlockSpec(shp, lambda: tuple(0 for _ in shp))
    smem_spec = pl.BlockSpec(memory_space=pltpu.MemorySpace.SMEM)

    ncat = n1p + n2s
    cost = pl.CostEstimate(
        flops=int(2 * ncat * fp * hp + 2 * ncat * hp * dp
                  + 2 * n1p * dp * n2l + 2 * dp * n2l),
        transcendentals=int(n1p * n2l),
        bytes_accessed=int(4 * x1.size + 4 * x2.size + 2 * w1p.size + 2 * w2p.size
                           + 4 * b1p.size + 4 * b2p.size + 8 + 4 * n1p * n2l),
    )

    out_padded = pl.pallas_call(
        _rbf_covar_kernel,
        out_shape=jax.ShapeDtypeStruct((n1p, n2l), jnp.float32),
        grid=(),  # toy sizes: single invocation, full-array blocks in VMEM
        in_specs=[smem_spec,
                  full(x1.shape), full(x2.shape),
                  full(w1p.shape), full(b1p.shape),
                  full(w2p.shape), full(b2p.shape)],
        out_specs=full((n1p, n2l)),
        scratch_shapes=[pltpu.VMEM((ncat, fp), jnp.float32),
                        pltpu.VMEM((n2l, dp), jnp.float32)],
        compiler_params=pltpu.CompilerParams(vmem_limit_bytes=32 << 20),
        cost_estimate=cost,
    )(hyp, x1, x2, w1p, b1p, w2p, b2p)

    return out_padded[:n1, :n2]


def init_params(key, in_features, hidden, d):
    """Deterministic synthetic feature-extractor params (Linear->ReLU->Linear)."""
    k1, k2 = jax.random.split(key)
    s1 = 1.0 / math.sqrt(in_features)
    s2 = 1.0 / math.sqrt(hidden)
    w1 = jax.random.uniform(k1, (in_features, hidden), jnp.float32, -s1, s1)
    b1 = jnp.zeros((1, hidden), jnp.float32)
    w2 = jax.random.uniform(k2, (hidden, d), jnp.float32, -s2, s2)
    b2 = jnp.zeros((1, d), jnp.float32)
    return (w1, b1, w2, b2)


def reference_forward(x1_nchw, x2_nchw, params,
                      lengthscale=_LOG2, outputscale=_LOG2):
    """Pure-JAX f32 reference for sanity checking."""
    w1, b1, w2, b2 = params

    def feat(x):
        x = x.reshape(x.shape[0], -1).astype(jnp.float32)
        h = jnp.maximum(x @ w1 + b1, 0.0)
        return h @ w2 + b2

    f1 = feat(x1_nchw) / lengthscale
    f2 = feat(x2_nchw) / lengthscale
    sq = (jnp.sum(f1 ** 2, -1, keepdims=True)
          - 2.0 * f1 @ f2.T
          + jnp.sum(f2 ** 2, -1, keepdims=True).T)
    sq = jnp.maximum(sq, 0.0)
    return outputscale * jnp.exp(-0.5 * sq)


if __name__ == "__main__":
    key = jax.random.PRNGKey(0)
    kx1, kx2, kp = jax.random.split(key, 3)

    # Small shapes consistent with the module: NCHW image-like inputs.
    N1, N2, C, H, W = 8, 16, 4, 8, 8
    D = 200          # matches RBFModule default d=200
    HIDDEN = 64
    F = C * H * W

    x1 = jax.random.normal(kx1, (N1, C, H, W), jnp.float32)
    x2 = jax.random.normal(kx2, (N2, C, H, W), jnp.float32)
    params = init_params(kp, F, HIDDEN, D)
    padded_params = prepare_params(params)   # one-time: padding/casting hoisted out

    forward = jax.jit(rbf_module_forward)
    covar = jax.block_until_ready(forward(x1, x2, padded_params))
    ref = jax.block_until_ready(reference_forward(x1, x2, params))

    assert covar.shape == (N1, N2)
    # bf16 MXU operands (f32 accumulation, consistently rounded sq terms).
    assert jnp.allclose(covar, ref, atol=1e-2, rtol=5e-2), "mismatch vs reference"

    print("KERNEL_OK")
</pallas_src>

<mosaic_0001>
module attributes {stable_mosaic.version = 11 : i64} {
  func.func @_rbf_covar_kernel(%arg0: memref<2xf32, #tpu.memory_space<smem>>, %arg1: memref<8x256xf32, #tpu.memory_space<vmem>>, %arg2: memref<16x256xf32, #tpu.memory_space<vmem>>, %arg3: memref<256x128xbf16, #tpu.memory_space<vmem>>, %arg4: memref<1x128xf32, #tpu.memory_space<vmem>>, %arg5: memref<128x256xbf16, #tpu.memory_space<vmem>>, %arg6: memref<1x256xf32, #tpu.memory_space<vmem>>, %arg7: memref<8x128xf32, #tpu.memory_space<vmem>>, %arg8: memref<24x256xf32, #tpu.memory_space<vmem>>, %arg9: memref<128x256xf32, #tpu.memory_space<vmem>>) attributes {dimension_semantics = [], scalar_prefetch = 0 : i64, scratch_operands = 2 : i64, tpu.core_type = #tpu.core_type<tc>} {
    %c0 = arith.constant 0 : index
    %c0_0 = arith.constant 0 : index
    %0 = vector.load %arg1[%c0, %c0_0] : memref<8x256xf32, #tpu.memory_space<vmem>>, vector<8x256xf32>
    %c0_1 = arith.constant 0 : index
    %c0_2 = arith.constant 0 : index
    %1 = vector.load %arg8[%c0_1, %c0_2] : memref<24x256xf32, #tpu.memory_space<vmem>>, vector<8x256xf32>
    tpu.vector_store %arg8[%c0_1, %c0_2], %0 {strides = array<i32>} : memref<24x256xf32, #tpu.memory_space<vmem>>, vector<8x256xf32>,
    %c0_3 = arith.constant 0 : index
    %c0_4 = arith.constant 0 : index
    %2 = vector.load %arg2[%c0_3, %c0_4] : memref<16x256xf32, #tpu.memory_space<vmem>>, vector<16x256xf32>
    %c8 = arith.constant 8 : index
    %c0_5 = arith.constant 0 : index
    %3 = vector.load %arg8[%c8, %c0_5] : memref<24x256xf32, #tpu.memory_space<vmem>>, vector<16x256xf32>
    tpu.vector_store %arg8[%c8, %c0_5], %2 {strides = array<i32>} : memref<24x256xf32, #tpu.memory_space<vmem>>, vector<16x256xf32>,
    %c0_6 = arith.constant 0 : index
    %c0_7 = arith.constant 0 : index
    %4 = vector.load %arg8[%c0_6, %c0_7] : memref<24x256xf32, #tpu.memory_space<vmem>>, vector<24x256xf32>
    %5 = arith.truncf %4 : vector<24x256xf32> to vector<24x256xbf16>
    %c0_8 = arith.constant 0 : index
    %c0_9 = arith.constant 0 : index
    %6 = vector.load %arg3[%c0_8, %c0_9] : memref<256x128xbf16, #tpu.memory_space<vmem>>, vector<256x128xbf16>
    %cst = arith.constant dense<0.000000e+00> : vector<24x128xf32>
    %7 = tpu.matmul %5, %6, %cst {dimension_numbers = #tpu.dot_dimension_numbers<[1], [0], [0], [1], [0, 0, 1, 1], [], []>} : vector<24x256xbf16>, vector<256x128xbf16>, vector<24x128xf32> -> vector<24x128xf32>
    %c0_10 = arith.constant 0 : index
    %c0_11 = arith.constant 0 : index
    %8 = vector.load %arg4[%c0_10, %c0_11] : memref<1x128xf32, #tpu.memory_space<vmem>>, vector<1x128xf32>
    %9 = vector.broadcast %8 : vector<1x128xf32> to vector<24x128xf32>
    %10 = arith.addf %7, %9 : vector<24x128xf32>
    %cst_12 = arith.constant 0.000000e+00 : f32
    %11 = vector.broadcast %cst_12 : f32 to vector<24x128xf32>
    %12 = arith.maximumf %10, %11 : vector<24x128xf32>
    %13 = arith.truncf %12 : vector<24x128xf32> to vector<24x128xbf16>
    %c0_13 = arith.constant 0 : index
    %c0_14 = arith.constant 0 : index
    %14 = vector.load %arg5[%c0_13, %c0_14] : memref<128x256xbf16, #tpu.memory_space<vmem>>, vector<128x256xbf16>
    %cst_15 = arith.constant dense<0.000000e+00> : vector<24x256xf32>
    %15 = tpu.matmul %13, %14, %cst_15 {dimension_numbers = #tpu.dot_dimension_numbers<[1], [0], [0], [1], [0, 0, 1, 1], [], []>} : vector<24x128xbf16>, vector<128x256xbf16>, vector<24x256xf32> -> vector<24x256xf32>
    %c0_16 = arith.constant 0 : index
    %c0_17 = arith.constant 0 : index
    %16 = vector.load %arg6[%c0_16, %c0_17] : memref<1x256xf32, #tpu.memory_space<vmem>>, vector<1x256xf32>
    %17 = vector.broadcast %16 : vector<1x256xf32> to vector<24x256xf32>
    %18 = arith.addf %15, %17 : vector<24x256xf32>
    %19 = vector.extract_strided_slice %18 {offsets = [0, 0], sizes = [8, 256], strides = [1, 1]} : vector<24x256xf32> to vector<8x256xf32>
    %20 = arith.truncf %19 : vector<8x256xf32> to vector<8x256xbf16>
    %21 = vector.extract_strided_slice %18 {offsets = [8, 0], sizes = [16, 256], strides = [1, 1]} : vector<24x256xf32> to vector<16x256xf32>
    %22 = arith.truncf %21 : vector<16x256xf32> to vector<16x256xbf16>
    %23 = arith.extf %22 : vector<16x256xbf16> to vector<16x256xf32>
    %c0_18 = arith.constant 0 : index
    %c0_19 = arith.constant 0 : index
    %24 = vector.load %arg9[%c0_18, %c0_19] : memref<128x256xf32, #tpu.memory_space<vmem>>, vector<16x256xf32>
    tpu.vector_store %arg9[%c0_18, %c0_19], %23 {strides = array<i32>} : memref<128x256xf32, #tpu.memory_space<vmem>>, vector<16x256xf32>,
    %cst_20 = arith.constant 0.000000e+00 : f32
    %25 = vector.broadcast %cst_20 : f32 to vector<112x256xf32>
    %c16 = arith.constant 16 : index
    %c0_21 = arith.constant 0 : index
    %26 = vector.load %arg9[%c16, %c0_21] : memref<128x256xf32, #tpu.memory_space<vmem>>, vector<112x256xf32>
    tpu.vector_store %arg9[%c16, %c0_21], %25 {strides = array<i32>} : memref<128x256xf32, #tpu.memory_space<vmem>>, vector<112x256xf32>,
    %c0_22 = arith.constant 0 : index
    %c0_23 = arith.constant 0 : index
    %27 = vector.load %arg9[%c0_22, %c0_23] : memref<128x256xf32, #tpu.memory_space<vmem>>, vector<128x256xf32>
    %28 = arith.truncf %27 : vector<128x256xf32> to vector<128x256xbf16>
    %cst_24 = arith.constant dense<0.000000e+00> : vector<8x128xf32>
    %29 = tpu.matmul %20, %28, %cst_24 {dimension_numbers = #tpu.dot_dimension_numbers<[1], [1], [0], [0], [0, 0, 1, 0], [], []>} : vector<8x256xbf16>, vector<128x256xbf16>, vector<8x128xf32> -> vector<8x128xf32>
    %30 = arith.extf %20 : vector<8x256xbf16> to vector<8x256xf32>
    %31 = arith.mulf %30, %30 : vector<8x256xf32>
    %cst_25 = arith.constant dense<0.000000e+00> : vector<8xf32>
    %32 = vector.multi_reduction <add>, %31, %cst_25 [1] : vector<8x256xf32> to vector<8xf32>
    %33 = vector.shape_cast %32 : vector<8xf32> to vector<8x1xf32>
    %cst_26 = arith.constant 1.000000e+00 : f32
    %34 = vector.broadcast %cst_26 : f32 to vector<1x256xf32>
    %35 = arith.mulf %27, %27 : vector<128x256xf32>
    %cst_27 = arith.constant dense<0.000000e+00> : vector<1x128xf32>
    %36 = tpu.matmul %34, %35, %cst_27 {dimension_numbers = #tpu.dot_dimension_numbers<[1], [1], [0], [0], [0, 0, 1, 0], [], []>} : vector<1x256xf32>, vector<128x256xf32>, vector<1x128xf32> -> vector<1x128xf32>
    %cst_28 = arith.constant 2.000000e+00 : f32
    %37 = vector.broadcast %cst_28 : f32 to vector<8x128xf32>
    %38 = arith.mulf %37, %29 : vector<8x128xf32>
    %39 = vector.broadcast %33 : vector<8x1xf32> to vector<8x128xf32>
    %40 = arith.subf %39, %38 : vector<8x128xf32>
    %41 = vector.broadcast %36 : vector<1x128xf32> to vector<8x128xf32>
    %42 = arith.addf %40, %41 : vector<8x128xf32>
    %cst_29 = arith.constant 0.000000e+00 : f32
    %43 = vector.broadcast %cst_29 : f32 to vector<8x128xf32>
    %44 = arith.maximumf %42, %43 : vector<8x128xf32>
    %c0_30 = arith.constant 0 : index
    %45 = memref.load %arg0[%c0_30] : memref<2xf32, #tpu.memory_space<smem>>
    %c1 = arith.constant 1 : index
    %46 = memref.load %arg0[%c1] : memref<2xf32, #tpu.memory_space<smem>>
    %47 = vector.broadcast %45 : f32 to vector<8x128xf32>
    %48 = arith.mulf %47, %44 : vector<8x128xf32>
    %49 = math.exp %48 : vector<8x128xf32>
    %50 = vector.broadcast %46 : f32 to vector<8x128xf32>
    %51 = arith.mulf %50, %49 : vector<8x128xf32>
    %c0_31 = arith.constant 0 : index
    %c0_32 = arith.constant 0 : index
    %52 = vector.load %arg7[%c0_31, %c0_32] : memref<8x128xf32, #tpu.memory_space<vmem>>, vector<8x128xf32>
    tpu.vector_store %arg7[%c0_31, %c0_32], %51 {strides = array<i32>} : memref<8x128xf32, #tpu.memory_space<vmem>>, vector<8x128xf32>,
    return
  }
}

</mosaic_0001>

<llo_original>
// kernel: rbf_module_forward.1
$region0: #{rbf_module_forward.1}
  #allocation0 [shape = 'u32[]', space=smem, size = 0x4, offset = 0x4, fixed_abs, tag = 'smem constant byte address 0x4 - core index']
  #allocation1 [shape = 'u32[144,128]{1,0:T(1,128)}', space=vmem, size = 0x12000, scoped, tag = 'internal scratch']
  #allocation2 [shape = 'f32[24,256]{1,0:T(8,128)}', space=vmem, size = 0x6000, scoped, tag = 'scratch operand']
  #allocation3 [shape = 'f32[128,256]{1,0:T(8,128)}', space=vmem, size = 0x20000, scoped, tag = 'scratch operand']
  %s0 = inlined_call_operand.vmem [shape: f32[2], index: 0, kind: input, shape index: {}]
  %s1 = inlined_call_operand.vmem [shape: f32[8,256], index: 1, kind: input, shape index: {}]
  %s2 = inlined_call_operand.vmem [shape: f32[16,256], index: 2, kind: input, shape index: {}]
  %s3 = inlined_call_operand.vmem [shape: bf16[256,128], index: 3, kind: input, shape index: {}]
  %s4 = inlined_call_operand.vmem [shape: f32[1,128], index: 4, kind: input, shape index: {}]
  %s5 = inlined_call_operand.vmem [shape: bf16[128,256], index: 5, kind: input, shape index: {}]
  %s6 = inlined_call_operand.vmem [shape: f32[1,256], index: 6, kind: input, shape index: {}]
  %s7 = inlined_call_operand.hbm [shape: f32[8,128], index: 7, kind: output, shape index: {}]
  %s8 = sld [smem:[#allocation0]]
  $region42: #{rbf_module_forward.1} parent=0
    _
  %s10 = ssub.s32 1, %s8
  %s11 = scalar_select 0, %s10, %s8
  $region1: #{rbf_module_forward.1} parent=0
    #allocation4 [shape = 'u8[512]{0}', space=smem, size = 0x200, scoped, tag = 'input window, operand 0, single buffered']
    #allocation5 [shape = 's32[1]{0}', space=sflag, size = 0x4, scoped, tag = 'scoped memory for rbf_module_forward.1']
    #allocation6 [shape = 's32[1]{0}', space=sflag, size = 0x4, scoped, tag = 'scoped memory for rbf_module_forward.1']
    #allocation7 [shape = 'u8[4096]{0}', space=vmem, size = 0x1000, scoped, tag = 'output window, operand 0, single buffered']
    %12 = vsyncpa [#allocation6], 0
    %13 = vsyncpa [#allocation5], 0
    // Predicated region
    $region2: #{rbf_module_forward.1} parent=1 // pred_check
      _
    $region3: #{rbf_module_forward.1} parent=1 // pred_check_branch
      %15 = sbr.rel (0) target = $region5
    $region4: #{rbf_module_forward.1} parent=1 // pred_region
      %s17 = ssub.s32 16, 16
      %18 = vsyncadd [#allocation6], %s17
      %s20 = sshll.u32 %s0, 4
      %s21 = int_to_ptr.vmem [resolvable:$true] %s20
      %23 = dma.vmem_to_smem %s21, 16, [#allocation4], [#allocation6]
    $region5: #{rbf_module_forward.1} parent=1 // pred_fallthru
      _
    // Predicated region
    $region6: #{rbf_module_forward.1} parent=1 // pred_check
      _
    $region7: #{rbf_module_forward.1} parent=1 // pred_check_branch
      %25 = sbr.rel (0) target = $region9
    $region8: #{rbf_module_forward.1} parent=1 // pred_region
      _
    $region9: #{rbf_module_forward.1} parent=1 // pred_fallthru
      _
    // Predicated region
    $region10: #{rbf_module_forward.1} parent=1 // pred_check
      _
    $region11: #{rbf_module_forward.1} parent=1 // pred_check_branch
      %27 = sbr.rel (0) target = $region13
    $region12: #{rbf_module_forward.1} parent=1 // pred_region
      _
    $region13: #{rbf_module_forward.1} parent=1 // pred_fallthru
      _
    // Predicated region
    $region14: #{rbf_module_forward.1} parent=1 // pred_check
      _
    $region15: #{rbf_module_forward.1} parent=1 // pred_check_branch
      %29 = sbr.rel (0) target = $region17
    $region16: #{rbf_module_forward.1} parent=1 // pred_region
      _
    $region17: #{rbf_module_forward.1} parent=1 // pred_fallthru
      _
    // Predicated region
    $region18: #{rbf_module_forward.1} parent=1 // pred_check
      _
    $region19: #{rbf_module_forward.1} parent=1 // pred_check_branch
      %31 = sbr.rel (0) target = $region21
    $region20: #{rbf_module_forward.1} parent=1 // pred_region
      _
    $region21: #{rbf_module_forward.1} parent=1 // pred_fallthru
      _
    // Predicated region
    $region22: #{rbf_module_forward.1} parent=1 // pred_check
      _
    $region23: #{rbf_module_forward.1} parent=1 // pred_check_branch
      %33 = sbr.rel (0) target = $region25
    $region24: #{rbf_module_forward.1} parent=1 // pred_region
      _
    $region25: #{rbf_module_forward.1} parent=1 // pred_fallthru
      _
    // Predicated region
    $region26: #{rbf_module_forward.1} parent=1 // pred_check
      _
    $region27: #{rbf_module_forward.1} parent=1 // pred_check_branch
      %35 = sbr.rel (0) target = $region29
    $region28: #{rbf_module_forward.1} parent=1 // pred_region
      _
    $region29: #{rbf_module_forward.1} parent=1 // pred_fallthru
      _
    // Predicated region
    $region30: #{rbf_module_forward.1} parent=1 // pred_check
      _
    $region31: #{rbf_module_forward.1} parent=1 // pred_check_branch
      %37 = sbr.rel (0) target = $region33
    $region32: #{rbf_module_forward.1} parent=1 // pred_region
      %38 = dma.done [#allocation6], 16
    $region33: #{rbf_module_forward.1} parent=1 // pred_fallthru
      _
    %39 = sfence
    %v41 = vld [vmem:[%s1] sm:$0xff]
    %v42 = vld [vmem:[%s1 + $0x8] sm:$0xff]
    %43 = vst [vmem:[#allocation2] sm:$0xff] %v41
    %44 = vst [vmem:[#allocation2 + $0x8] sm:$0xff] %v42
    %v45 = vld [vmem:[%s2] sm:$0xff]
    %v46 = vld [vmem:[%s2 + $0x8] sm:$0xff]
    %v47 = vld [vmem:[%s2 + $0x10] sm:$0xff]
    %v48 = vld [vmem:[%s2 + $0x18] sm:$0xff]
    %49 = vst [vmem:[#allocation2 + $0x10] sm:$0xff] %v45
    %50 = vst [vmem:[#allocation2 + $0x18] sm:$0xff] %v46
    %51 = vst [vmem:[#allocation2 + $0x20] sm:$0xff] %v47
    %52 = vst [vmem:[#allocation2 + $0x28] sm:$0xff] %v48
    %v53 = vld [vmem:[#allocation2] sm:$0xff]
    %v54 = vld [vmem:[#allocation2 + $0x8] sm:$0xff]
    %v55 = vld [vmem:[#allocation2 + $0x10] sm:$0xff]
    %v56 = vld [vmem:[#allocation2 + $0x18] sm:$0xff]
    %v57 = vld [vmem:[#allocation2 + $0x20] sm:$0xff]
    %v58 = vld [vmem:[#allocation2 + $0x28] sm:$0xff]
    %v59 = vpack.c.bf16 %v55, %v53
    %v60 = vpack.c.bf16 %v56, %v54
    %v61 = vpack.c.bf16 %v57, %v57
    %v62 = vpack.c.bf16 %v58, %v58
    %v63 = vld [vmem:[%s3] sm:$0xf]
    %v64 = vld [vmem:[%s3 + $0x4] sm:$0xf]
    %v65 = vld [vmem:[%s3 + $0x8] sm:$0xf]
    %v66 = vld [vmem:[%s3 + $0xc] sm:$0xf]
    %v67 = vld [vmem:[%s3 + $0x10] sm:$0xf]
    %v68 = vld [vmem:[%s3 + $0x14] sm:$0xf]
    %v69 = vld [vmem:[%s3 + $0x18] sm:$0xf]
    %v70 = vld [vmem:[%s3 + $0x1c] sm:$0xf]
    %v71 = vld [vmem:[%s3 + $0x20] sm:$0xf]
    %v72 = vld [vmem:[%s3 + $0x24] sm:$0xf]
    %v73 = vld [vmem:[%s3 + $0x28] sm:$0xf]
    %v74 = vld [vmem:[%s3 + $0x2c] sm:$0xf]
    %v75 = vld [vmem:[%s3 + $0x30] sm:$0xf]
    %v76 = vld [vmem:[%s3 + $0x34] sm:$0xf]
    %v77 = vld [vmem:[%s3 + $0x38] sm:$0xf]
    %v78 = vld [vmem:[%s3 + $0x3c] sm:$0xf]
    %v79 = vld [vmem:[%s3 + $0x40] sm:$0xf]
    %v80 = vld [vmem:[%s3 + $0x44] sm:$0xf]
    %v81 = vld [vmem:[%s3 + $0x48] sm:$0xf]
    %v82 = vld [vmem:[%s3 + $0x4c] sm:$0xf]
    %v83 = vld [vmem:[%s3 + $0x50] sm:$0xf]
    %v84 = vld [vmem:[%s3 + $0x54] sm:$0xf]
    %v85 = vld [vmem:[%s3 + $0x58] sm:$0xf]
    %v86 = vld [vmem:[%s3 + $0x5c] sm:$0xf]
    %v87 = vld [vmem:[%s3 + $0x60] sm:$0xf]
    %v88 = vld [vmem:[%s3 + $0x64] sm:$0xf]
    %v89 = vld [vmem:[%s3 + $0x68] sm:$0xf]
    %v90 = vld [vmem:[%s3 + $0x6c] sm:$0xf]
    %v91 = vld [vmem:[%s3 + $0x70] sm:$0xf]
    %v92 = vld [vmem:[%s3 + $0x74] sm:$0xf]
    %v93 = vld [vmem:[%s3 + $0x78] sm:$0xf]
    %v94 = vld [vmem:[%s3 + $0x7c] sm:$0xf]
    %v95 = vld [vmem:[%s4] sm:$0x1]
    %v97 = vlaneseq
    %v98 = vshrl.u32 %v97, 7
    %v99 = vsub.s32 0, %v98
    %v100 = vrot.slane %v95, %v99
    %v134 = vunpack.c.l.b16 %v63
    %v135 = vunpack.c.l.b16 %v64
    %v136 = vunpack.c.l.b16 %v65
    %v137 = vunpack.c.l.b16 %v66
    %v138 = vunpack.c.l.b16 %v67
    %v139 = vunpack.c.l.b16 %v68
    %v140 = vunpack.c.l.b16 %v69
    %v141 = vunpack.c.l.b16 %v70
    %v142 = vunpack.c.l.b16 %v71
    %v143 = vunpack.c.l.b16 %v72
    %v144 = vunpack.c.l.b16 %v73
    %v145 = vunpack.c.l.b16 %v74
    %v146 = vunpack.c.l.b16 %v75
    %v147 = vunpack.c.l.b16 %v76
    %v148 = vunpack.c.l.b16 %v77
    %v149 = vunpack.c.l.b16 %v78
    %v150 = vunpack.c.l.b16 %v79
    %v151 = vunpack.c.l.b16 %v80
    %v152 = vunpack.c.l.b16 %v81
    %v153 = vunpack.c.l.b16 %v82
    %v154 = vunpack.c.l.b16 %v83
    %v155 = vunpack.c.l.b16 %v84
    %v156 = vunpack.c.l.b16 %v85
    %v157 = vunpack.c.l.b16 %v86
    %v158 = vunpack.c.l.b16 %v87
    %v159 = vunpack.c.l.b16 %v88
    %v160 = vunpack.c.l.b16 %v89
    %v161 = vunpack.c.l.b16 %v90
    %v162 = vunpack.c.l.b16 %v91
    %v163 = vunpack.c.l.b16 %v92
    %v164 = vunpack.c.l.b16 %v93
    %v165 = vunpack.c.l.b16 %v94
    %v166 = vpack.c.b16 %v135, %v134
    %v167 = vpack.c.b16 %v137, %v136
    %v168 = vpack.c.b16 %v139, %v138
    %v169 = vpack.c.b16 %v141, %v140
    %v170 = vpack.c.b16 %v143, %v142
    %v171 = vpack.c.b16 %v145, %v144
    %v172 = vpack.c.b16 %v147, %v146
    %v173 = vpack.c.b16 %v149, %v148
    %v174 = vpack.c.b16 %v151, %v150
    %v175 = vpack.c.b16 %v153, %v152
    %v176 = vpack.c.b16 %v155, %v154
    %v177 = vpack.c.b16 %v157, %v156
    %v178 = vpack.c.b16 %v159, %v158
    %v179 = vpack.c.b16 %v161, %v160
    %v180 = vpack.c.b16 %v163, %v162
    %v181 = vpack.c.b16 %v165, %v164
    %198 = vmatprep.subr.bf16.mxu0 0
    %199 = vmatpush1.bf16.msra.mxu0 %v173
    %200 = vmatprep.subr.bf16.mxu0 0
    %201 = vmatpush1.bf16.msra.mxu0 %v172
    %202 = vmatprep.subr.bf16.mxu0 0
    %203 = vmatpush1.bf16.msra.mxu0 %v171
    %204 = vmatprep.subr.bf16.mxu0 0
    %205 = vmatpush1.bf16.msra.mxu0 %v170
    %206 = vmatprep.subr.bf16.mxu0 0
    %207 = vmatpush1.bf16.msra.mxu0 %v169
    %208 = vmatprep.subr.bf16.mxu0 0
    %209 = vmatpush1.bf16.msra.mxu0 %v168
    %210 = vmatprep.subr.bf16.mxu0 0
    %211 = vmatpush1.bf16.msra.mxu0 %v167
    %212 = vmatprep.subr.bf16.mxu0 0
    %213 = vmatpush1.bf16.msra.mxu0 %v166
    %214 = vmatprep.subr.bf16.mxu0 0
    %215 = vmatpush2.bf16.msra.mxu0 %v181
    %216 = vmatprep.subr.bf16.mxu0 0
    %217 = vmatpush2.bf16.msra.mxu0 %v180
    %218 = vmatprep.subr.bf16.mxu0 0
    %219 = vmatpush2.bf16.msra.mxu0 %v179
    %220 = vmatprep.subr.bf16.mxu0 0
    %221 = vmatpush2.bf16.msra.mxu0 %v178
    %222 = vmatprep.subr.bf16.mxu0 0
    %223 = vmatpush2.bf16.msra.mxu0 %v177
    %224 = vmatprep.subr.bf16.mxu0 0
    %225 = vmatpush2.bf16.msra.mxu0 %v176
    %226 = vmatprep.subr.bf16.mxu0 0
    %227 = vmatpush2.bf16.msra.mxu0 %v175
    %228 = vmatprep.subr.bf16.mxu0 0
    %229 = vmatpush2.bf16.msra.mxu0 %v174
    %230 = vmatprep.mubr.bf16.mxu0 %v60
    %231 = vmatmul.mubr.bf16.gmra.mxu0 %v59
    %v232 = vpop.f32.mrf.mxu0
    %v233 = vadd.f32 %v100, %v232
    %v234 = vpop.f32.mrf.mxu0
    %v235 = vpop.f32.mrf.mxu0
    %v236 = vadd.f32 %v100, %v235
    %v237 = vpop.f32.mrf.mxu0
    %238 = vmatprep.mubr.bf16.mxu0 %v62
    %239 = vmatmul.mubr.bf16.gmra.mxu0 %v61
    %v240 = vpop.f32.mrf.mxu0
    %v241 = vadd.f32 %v100, %v240
    %v242 = vpop.f32.mrf.mxu0
    %v243 = vpop.f32.mrf.mxu0
    %v244 = vpop.f32.mrf.mxu0
    %245 = vdwg.mxu0
    %v246 = vmax.f32 %v233, 0.0
    %v247 = vmax.f32 %v236, 0.0
    %v248 = vmax.f32 %v241, 0.0
    %v249 = vpack.c.bf16 %v247, %v246
    %v250 = vpack.c.bf16 %v248, %v248
    %v251 = vld [vmem:[%s5] sm:$0xff]
    %v252 = vld [vmem:[%s5 + $0x8] sm:$0xff]
    %v253 = vld [vmem:[%s5 + $0x10] sm:$0xff]
    %v254 = vld [vmem:[%s5 + $0x18] sm:$0xff]
    %v255 = vld [vmem:[%s5 + $0x20] sm:$0xff]
    %v256 = vld [vmem:[%s5 + $0x28] sm:$0xff]
    %v257 = vld [vmem:[%s5 + $0x30] sm:$0xff]
    %v258 = vld [vmem:[%s5 + $0x38] sm:$0xff]
    %v259 = vld [vmem:[%s5 + $0x40] sm:$0xff]
    %v260 = vld [vmem:[%s5 + $0x48] sm:$0xff]
    %v261 = vld [vmem:[%s5 + $0x50] sm:$0xff]
    %v262 = vld [vmem:[%s5 + $0x58] sm:$0xff]
    %v263 = vld [vmem:[%s5 + $0x60] sm:$0xff]
    %v264 = vld [vmem:[%s5 + $0x68] sm:$0xff]
    %v265 = vld [vmem:[%s5 + $0x70] sm:$0xff]
    %v266 = vld [vmem:[%s5 + $0x78] sm:$0xff]
    %v267 = vld [vmem:[%s6] sm:$0x3]
    %v269 = vlaneseq
    %v270 = vshrl.u32 %v269, 7
    %v271 = vsub.s32 0, %v270
    %v272 = vrot.slane %v267, %v271
    %v273 = vlaneseq
    %v274 = vshrl.u32 %v273, 7
    %v275 = vsub.s32 1, %v274
    %v276 = vrot.slane %v267, %v275
    %v295 = vunpack.c.l.b16 %v251
    %v296 = vunpack.c.h.b16 %v251
    %v297 = vunpack.c.l.b16 %v252
    %v298 = vunpack.c.h.b16 %v252
    %v299 = vunpack.c.l.b16 %v253
    %v300 = vunpack.c.h.b16 %v253
    %v301 = vunpack.c.l.b16 %v254
    %v302 = vunpack.c.h.b16 %v254
    %v303 = vunpack.c.l.b16 %v255
    %v304 = vunpack.c.h.b16 %v255
    %v305 = vunpack.c.l.b16 %v256
    %v306 = vunpack.c.h.b16 %v256
    %v307 = vunpack.c.l.b16 %v257
    %v308 = vunpack.c.h.b16 %v257
    %v309 = vunpack.c.l.b16 %v258
    %v310 = vunpack.c.h.b16 %v258
    %v311 = vunpack.c.l.b16 %v259
    %v312 = vunpack.c.h.b16 %v259
    %v313 = vunpack.c.l.b16 %v260
    %v314 = vunpack.c.h.b16 %v260
    %v315 = vunpack.c.l.b16 %v261
    %v316 = vunpack.c.h.b16 %v261
    %v317 = vunpack.c.l.b16 %v262
    %v318 = vunpack.c.h.b16 %v262
    %v319 = vunpack.c.l.b16 %v263
    %v320 = vunpack.c.h.b16 %v263
    %v321 = vunpack.c.l.b16 %v264
    %v322 = vunpack.c.h.b16 %v264
    %v323 = vunpack.c.l.b16 %v265
    %v324 = vunpack.c.h.b16 %v265
    %v325 = vunpack.c.l.b16 %v266
    %v326 = vunpack.c.h.b16 %v266
    %v327 = vpack.c.b16 %v297, %v295
    %v328 = vpack.c.b16 %v298, %v296
    %v329 = vpack.c.b16 %v301, %v299
    %v330 = vpack.c.b16 %v302, %v300
    %v331 = vpack.c.b16 %v305, %v303
    %v332 = vpack.c.b16 %v306, %v304
    %v333 = vpack.c.b16 %v309, %v307
    %v334 = vpack.c.b16 %v310, %v308
    %v335 = vpack.c.b16 %v313, %v311
    %v336 = vpack.c.b16 %v314, %v312
    %v337 = vpack.c.b16 %v317, %v315
    %v338 = vpack.c.b16 %v318, %v316
    %v339 = vpack.c.b16 %v321, %v319
    %v340 = vpack.c.b16 %v322, %v320
    %v341 = vpack.c.b16 %v325, %v323
    %v342 = vpack.c.b16 %v326, %v324
    %359 = vmatprep.subr.bf16.mxu0 %v342
    %360 = vmatpush1.bf16.msra.mxu0 %v341
    %361 = vmatprep.subr.bf16.mxu0 %v340
    %362 = vmatpush1.bf16.msra.mxu0 %v339
    %363 = vmatprep.subr.bf16.mxu0 %v338
    %364 = vmatpush1.bf16.msra.mxu0 %v337
    %365 = vmatprep.subr.bf16.mxu0 %v336
    %366 = vmatpush1.bf16.msra.mxu0 %v335
    %367 = vmatprep.subr.bf16.mxu0 %v334
    %368 = vmatpush1.bf16.msra.mxu0 %v333
    %369 = vmatprep.subr.bf16.mxu0 %v332
    %370 = vmatpush1.bf16.msra.mxu0 %v331
    %371 = vmatprep.subr.bf16.mxu0 %v330
    %372 = vmatpush1.bf16.msra.mxu0 %v329
    %373 = vmatprep.subr.bf16.mxu0 %v328
    %374 = vmatpush1.bf16.msra.mxu0 %v327
    %375 = vmatprep.subr.bf16.mxu0 0
    %376 = vmatpush2.bf16.msra.mxu0 0
    %377 = vmatprep.subr.bf16.mxu0 0
    %378 = vmatpush2.bf16.msra.mxu0 0
    %379 = vmatprep.subr.bf16.mxu0 0
    %380 = vmatpush2.bf16.msra.mxu0 0
    %381 = vmatprep.subr.bf16.mxu0 0
    %382 = vmatpush2.bf16.msra.mxu0 0
    %383 = vmatprep.subr.bf16.mxu0 0
    %384 = vmatpush2.bf16.msra.mxu0 0
    %385 = vmatprep.subr.bf16.mxu0 0
    %386 = vmatpush2.bf16.msra.mxu0 0
    %387 = vmatprep.subr.bf16.mxu0 0
    %388 = vmatpush2.bf16.msra.mxu0 0
    %389 = vmatprep.subr.bf16.mxu0 0
    %390 = vmatpush2.bf16.msra.mxu0 0
    %391 = vmatprep.mubr.bf16.mxu0 0
    %392 = vmatmul.mubr.bf16.gmra.mxu0 %v249
    %v393 = vpop.f32.mrf.mxu0
    %v394 = vadd.f32 %v272, %v393
    %v395 = vpop.f32.mrf.mxu0
    %v396 = vadd.f32 %v276, %v395
    %v397 = vpop.f32.mrf.mxu0
    %v398 = vadd.f32 %v272, %v397
    %v399 = vpop.f32.mrf.mxu0
    %v400 = vadd.f32 %v276, %v399
    %401 = vmatprep.mubr.bf16.mxu0 0
    %402 = vmatmul.mubr.bf16.gmra.mxu0 %v250
    %v403 = vpop.f32.mrf.mxu0
    %v404 = vadd.f32 %v272, %v403
    %v405 = vpop.f32.mrf.mxu0
    %v406 = vadd.f32 %v276, %v405
    %v407 = vpop.f32.mrf.mxu0
    %v408 = vpop.f32.mrf.mxu0
    %409 = vdwg.mxu0
    %v410 = vpack.c.bf16 %v394, %v394
    %v411 = vpack.c.bf16 %v396, %v396
    %v412 = vpack.c.bf16 %v404, %v398
    %v413 = vpack.c.bf16 %v406, %v400
    %v414 = vunpack.c.l.bf16 %v412
    %v415 = vunpack.c.l.bf16 %v413
    %v416 = vunpack.c.h.bf16 %v412
    %v417 = vunpack.c.h.bf16 %v413
    %418 = vst [vmem:[#allocation3] sm:$0xff] %v414
    %419 = vst [vmem:[#allocation3 + $0x8] sm:$0xff] %v415
    %420 = vst [vmem:[#allocation3 + $0x10] sm:$0xff] %v416
    %421 = vst [vmem:[#allocation3 + $0x18] sm:$0xff] %v417
    %422 = vst [vmem:[#allocation3 + $0x20] sm:$0xff] 0.0
    %423 = vst [vmem:[#allocation3 + $0x28] sm:$0xff] 0.0
    %424 = vst [vmem:[#allocation3 + $0x30] sm:$0xff] 0.0
    %425 = vst [vmem:[#allocation3 + $0x38] sm:$0xff] 0.0
    %426 = vst [vmem:[#allocation3 + $0x40] sm:$0xff] 0.0
    %427 = vst [vmem:[#allocation3 + $0x48] sm:$0xff] 0.0
    %428 = vst [vmem:[#allocation3 + $0x50] sm:$0xff] 0.0
    %429 = vst [vmem:[#allocation3 + $0x58] sm:$0xff] 0.0
    %430 = vst [vmem:[#allocation3 + $0x60] sm:$0xff] 0.0
    %431 = vst [vmem:[#allocation3 + $0x68] sm:$0xff] 0.0
    %432 = vst [vmem:[#allocation3 + $0x70] sm:$0xff] 0.0
    %433 = vst [vmem:[#allocation3 + $0x78] sm:$0xff] 0.0
    %434 = vst [vmem:[#allocation3 + $0x80] sm:$0xff] 0.0
    %435 = vst [vmem:[#allocation3 + $0x88] sm:$0xff] 0.0
    %436 = vst [vmem:[#allocation3 + $0x90] sm:$0xff] 0.0
    %437 = vst [vmem:[#allocation3 + $0x98] sm:$0xff] 0.0
    %438 = vst [vmem:[#allocation3 + $0xa0] sm:$0xff] 0.0
    %439 = vst [vmem:[#allocation3 + $0xa8] sm:$0xff] 0.0
    %440 = vst [vmem:[#allocation3 + $0xb0] sm:$0xff] 0.0
    %441 = vst [vmem:[#allocation3 + $0xb8] sm:$0xff] 0.0
    %442 = vst [vmem:[#allocation3 + $0xc0] sm:$0xff] 0.0
    %443 = vst [vmem:[#allocation3 + $0xc8] sm:$0xff] 0.0
    %444 = vst [vmem:[#allocation3 + $0xd0] sm:$0xff] 0.0
    %445 = vst [vmem:[#allocation3 + $0xd8] sm:$0xff] 0.0
    %446 = vst [vmem:[#allocation3 + $0xe0] sm:$0xff] 0.0
    %447 = vst [vmem:[#allocation3 + $0xe8] sm:$0xff] 0.0
    %448 = vst [vmem:[#allocation3 + $0xf0] sm:$0xff] 0.0
    %449 = vst [vmem:[#allocation3 + $0xf8] sm:$0xff] 0.0
    %v450 = vld [vmem:[#allocation3] sm:$0xff]
    %v451 = vld [vmem:[#allocation3 + $0x8] sm:$0xff]
    %v452 = vld [vmem:[#allocation3 + $0x10] sm:$0xff]
    %v453 = vld [vmem:[#allocation3 + $0x18] sm:$0xff]
    %v454 = vld [vmem:[#allocation3 + $0x20] sm:$0xff]
    %v455 = vld [vmem:[#allocation3 + $0x28] sm:$0xff]
    %v456 = vld [vmem:[#allocation3 + $0x30] sm:$0xff]
    %v457 = vld [vmem:[#allocation3 + $0x38] sm:$0xff]
    %v458 = vld [vmem:[#allocation3 + $0x40] sm:$0xff]
    %v459 = vld [vmem:[#allocation3 + $0x48] sm:$0xff]
    %v460 = vld [vmem:[#allocation3 + $0x50] sm:$0xff]
    %v461 = vld [vmem:[#allocation3 + $0x58] sm:$0xff]
    %v462 = vld [vmem:[#allocation3 + $0x60] sm:$0xff]
    %v463 = vld [vmem:[#allocation3 + $0x68] sm:$0xff]
    %v464 = vld [vmem:[#allocation3 + $0x70] sm:$0xff]
    %v465 = vld [vmem:[#allocation3 + $0x78] sm:$0xff]
    %v466 = vld [vmem:[#allocation3 + $0x80] sm:$0xff]
    %v467 = vld [vmem:[#allocation3 + $0x88] sm:$0xff]
    %v468 = vld [vmem:[#allocation3 + $0x90] sm:$0xff]
    %v469 = vld [vmem:[#allocation3 + $0x98] sm:$0xff]
    %v470 = vld [vmem:[#allocation3 + $0xa0] sm:$0xff]
    %v471 = vld [vmem:[#allocation3 + $0xa8] sm:$0xff]
    %v472 = vld [vmem:[#allocation3 + $0xb0] sm:$0xff]
    %v473 = vld [vmem:[#allocation3 + $0xb8] sm:$0xff]
    %v474 = vld [vmem:[#allocation3 + $0xc0] sm:$0xff]
    %v475 = vld [vmem:[#allocation3 + $0xc8] sm:$0xff]
    %v476 = vld [vmem:[#allocation3 + $0xd0] sm:$0xff]
    %v477 = vld [vmem:[#allocation3 + $0xd8] sm:$0xff]
    %v478 = vld [vmem:[#allocation3 + $0xe0] sm:$0xff]
    %v479 = vld [vmem:[#allocation3 + $0xe8] sm:$0xff]
    %v480 = vld [vmem:[#allocation3 + $0xf0] sm:$0xff]
    %v481 = vld [vmem:[#allocation3 + $0xf8] sm:$0xff]
    %v482 = vpack.c.bf16 %v452, %v450
    %v483 = vpack.c.bf16 %v453, %v451
    %v484 = vpack.c.bf16 %v456, %v454
    %v485 = vpack.c.bf16 %v457, %v455
    %v486 = vpack.c.bf16 %v460, %v458
    %v487 = vpack.c.bf16 %v461, %v459
    %v488 = vpack.c.bf16 %v464, %v462
    %v489 = vpack.c.bf16 %v465, %v463
    %v490 = vpack.c.bf16 %v468, %v466
    %v491 = vpack.c.bf16 %v469, %v467
    %v492 = vpack.c.bf16 %v472, %v470
    %v493 = vpack.c.bf16 %v473, %v471
    %v494 = vpack.c.bf16 %v476, %v474
    %v495 = vpack.c.bf16 %v477, %v475
    %v496 = vpack.c.bf16 %v480, %v478
    %v497 = vpack.c.bf16 %v481, %v479
    %498 = vmatprep.subr.bf16.mxu0 %v497
    %499 = vmatpush1.bf16.xpose.msra.mxu0 %v496
    %500 = vmatprep.subr.bf16.mxu0 %v495
    %501 = vmatpush1.bf16.xpose.msra.mxu0 %v494
    %502 = vmatprep.subr.bf16.mxu0 %v493
    %503 = vmatpush1.bf16.xpose.msra.mxu0 %v492
    %504 = vmatprep.subr.bf16.mxu0 %v491
    %505 = vmatpush1.bf16.xpose.msra.mxu0 %v490
    %506 = vmatprep.subr.bf16.mxu0 %v489
    %507 = vmatpush1.bf16.xpose.msra.mxu0 %v488
    %508 = vmatprep.subr.bf16.mxu0 %v487
    %509 = vmatpush1.bf16.xpose.msra.mxu0 %v486
    %510 = vmatprep.subr.bf16.mxu0 %v485
    %511 = vmatpush1.bf16.xpose.msra.mxu0 %v484
    %512 = vmatprep.subr.bf16.mxu0 %v483
    %513 = vmatpush1.bf16.xpose.msra.mxu0 %v482
    %514 = vmatprep.subr.bf16.mxu0 0
    %515 = vmatpush2.bf16.xpose.msra.mxu0 0
    %516 = vmatprep.subr.bf16.mxu0 0
    %517 = vmatpush2.bf16.xpose.msra.mxu0 0
    %518 = vmatprep.subr.bf16.mxu0 0
    %519 = vmatpush2.bf16.xpose.msra.mxu0 0
    %520 = vmatprep.subr.bf16.mxu0 0
    %521 = vmatpush2.bf16.xpose.msra.mxu0 0
    %522 = vmatprep.subr.bf16.mxu0 0
    %523 = vmatpush2.bf16.xpose.msra.mxu0 0
    %524 = vmatprep.subr.bf16.mxu0 0
    %525 = vmatpush2.bf16.xpose.msra.mxu0 0
    %526 = vmatprep.subr.bf16.mxu0 0
    %527 = vmatpush2.bf16.xpose.msra.mxu0 0
    %528 = vmatprep.subr.bf16.mxu0 0
    %529 = vmatpush2.bf16.xpose.msra.mxu0 0
    %530 = vmatprep.mubr.bf16.mxu0 %v411
    %531 = vmatmul.mubr.bf16.gmra.mxu0 %v410
    %v532 = vpop.f32.mrf.mxu0
    %v533 = vadd.f32 0.0, %v532
    %v534 = vpop.f32.mrf.mxu0
    %v535 = vpop.f32.mrf.mxu0
    %v536 = vpop.f32.mrf.mxu0
    %537 = vdwg.mxu0
    %v538 = vunpack.c.l.bf16 %v410
    %v539 = vunpack.c.l.bf16 %v411
    %v540 = vmul.f32 %v538, %v538
    %v541 = vmul.f32 %v539, %v539
    %v542 = vadd.f32 %v540, %v541
    %543 = vadd.xlane.f32.xlu0 %v542
    %v544 = vpop.xlane.xlu0 %543
    %v545 = vmul.f32 %v450, %v450
    %v546 = vmul.f32 %v451, %v451
    %v547 = vmul.f32 %v452, %v452
    %v548 = vmul.f32 %v453, %v453
    %v549 = vmul.f32 %v454, %v454
    %v550 = vmul.f32 %v455, %v455
    %v551 = vmul.f32 %v456, %v456
    %v552 = vmul.f32 %v457, %v457
    %v553 = vmul.f32 %v458, %v458
    %v554 = vmul.f32 %v459, %v459
    %v555 = vmul.f32 %v460, %v460
    %v556 = vmul.f32 %v461, %v461
    %v557 = vmul.f32 %v462, %v462
    %v558 = vmul.f32 %v463, %v463
    %v559 = vmul.f32 %v464, %v464
    %v560 = vmul.f32 %v465, %v465
    %v561 = vmul.f32 %v466, %v466
    %v562 = vmul.f32 %v467, %v467
    %v563 = vmul.f32 %v468, %v468
    %v564 = vmul.f32 %v469, %v469
    %v565 = vmul.f32 %v470, %v470
    %v566 = vmul.f32 %v471, %v471
    %v567 = vmul.f32 %v472, %v472
    %v568 = vmul.f32 %v473, %v473
    %v569 = vmul.f32 %v474, %v474
    %v570 = vmul.f32 %v475, %v475
    %v571 = vmul.f32 %v476, %v476
    %v572 = vmul.f32 %v477, %v477
    %v573 = vmul.f32 %v478, %v478
    %v574 = vmul.f32 %v479, %v479
    %v575 = vmul.f32 %v480, %v480
    %v576 = vmul.f32 %v481, %v481
    %577 = vmatprep.subr.mxu0 %v576
    %578 = vmatpush1.xpose.msra.mxu0 %v575
    %579 = vmatprep.subr.mxu0 %v574
    %580 = vmatpush1.xpose.msra.mxu0 %v573
    %581 = vmatprep.subr.mxu0 %v572
    %582 = vmatpush1.xpose.msra.mxu0 %v571
    %583 = vmatprep.subr.mxu0 %v570
    %584 = vmatpush1.xpose.msra.mxu0 %v569
    %585 = vmatprep.subr.mxu0 %v568
    %586 = vmatpush1.xpose.msra.mxu0 %v567
    %587 = vmatprep.subr.mxu0 %v566
    %588 = vmatpush1.xpose.msra.mxu0 %v565
    %589 = vmatprep.subr.mxu0 %v564
    %590 = vmatpush1.xpose.msra.mxu0 %v563
    %591 = vmatprep.subr.mxu0 %v562
    %592 = vmatpush1.xpose.msra.mxu0 %v561
    %593 = vmatprep.subr.mxu0 %v560
    %594 = vmatpush1.xpose.msra.mxu0 %v559
    %595 = vmatprep.subr.mxu0 %v558
    %596 = vmatpush1.xpose.msra.mxu0 %v557
    %597 = vmatprep.subr.mxu0 %v556
    %598 = vmatpush1.xpose.msra.mxu0 %v555
    %599 = vmatprep.subr.mxu0 %v554
    %600 = vmatpush1.xpose.msra.mxu0 %v553
    %601 = vmatprep.subr.mxu0 %v552
    %602 = vmatpush1.xpose.msra.mxu0 %v551
    %603 = vmatprep.subr.mxu0 %v550
    %604 = vmatpush1.xpose.msra.mxu0 %v549
    %605 = vmatprep.subr.mxu0 %v548
    %606 = vmatpush1.xpose.msra.mxu0 %v547
    %607 = vmatprep.subr.mxu0 %v546
    %608 = vmatpush1.xpose.msra.mxu0 %v545
    %609 = vmatprep.subr.mxu0 0.0
    %610 = vmatpush2.xpose.msra.mxu0 0.0
    %611 = vmatprep.subr.mxu0 0.0
    %612 = vmatpush2.xpose.msra.mxu0 0.0
    %613 = vmatprep.subr.mxu0 0.0
    %614 = vmatpush2.xpose.msra.mxu0 0.0
    %615 = vmatprep.subr.mxu0 0.0
    %616 = vmatpush2.xpose.msra.mxu0 0.0
    %617 = vmatprep.subr.mxu0 0.0
    %618 = vmatpush2.xpose.msra.mxu0 0.0
    %619 = vmatprep.subr.mxu0 0.0
    %620 = vmatpush2.xpose.msra.mxu0 0.0
    %621 = vmatprep.subr.mxu0 0.0
    %622 = vmatpush2.xpose.msra.mxu0 0.0
    %623 = vmatprep.subr.mxu0 0.0
    %624 = vmatpush2.xpose.msra.mxu0 0.0
    %625 = vmatprep.subr.mxu0 0.0
    %626 = vmatpush2.xpose.msra.mxu0 0.0
    %627 = vmatprep.subr.mxu0 0.0
    %628 = vmatpush2.xpose.msra.mxu0 0.0
    %629 = vmatprep.subr.mxu0 0.0
    %630 = vmatpush2.xpose.msra.mxu0 0.0
    %631 = vmatprep.subr.mxu0 0.0
    %632 = vmatpush2.xpose.msra.mxu0 0.0
    %633 = vmatprep.subr.mxu0 0.0
    %634 = vmatpush2.xpose.msra.mxu0 0.0
    %635 = vmatprep.subr.mxu0 0.0
    %636 = vmatpush2.xpose.msra.mxu0 0.0
    %637 = vmatprep.subr.mxu0 0.0
    %638 = vmatpush2.xpose.msra.mxu0 0.0
    %639 = vmatprep.subr.mxu0 0.0
    %640 = vmatpush2.xpose.msra.mxu0 0.0
    %641 = vmatprep.mubr.f32.mxu0 1.0
    %642 = vmatmul.mubr.f32.gmra.mxu0 1.0
    %v643 = vpop.f32.mrf.mxu0
    %v644 = vadd.f32 0.0, %v643
    %v645 = vpop.f32.mrf.mxu0
    %646 = vdwg.mxu0
    %v647 = vmul.f32 %v533, 2.0
    %v648 = vsub.f32 %v544, %v647
    %v649 = vlaneseq
    %v650 = vshrl.u32 %v649, 7
    %v651 = vsub.s32 0, %v650
    %v652 = vrot.slane %v644, %v651
    %v653 = vadd.f32 %v648, %v652
    %v654 = vmax.f32 %v653, 0.0
    %s655 = sld [smem:[#allocation4]]
    %s656 = sld [smem:[#allocation4 + $0x1]]
    %v657 = vstv %s655
    %v658 = vmul.f32 %v657, %v654
    %v659 = vmul.f32 %v658, 1.442695
    %v660 = vpow.pop %v659
    %v661 = vstv %s656
    %v662 = vmul.f32 %v661, %v660
    %663 = vst [vmem:[#allocation7] sm:$0xff] %v662
    // Predicated region
    $region34: #{rbf_module_forward.1} parent=1 // pred_check
      _
    $region35: #{rbf_module_forward.1} parent=1 // pred_check_branch
      %665 = sbr.rel (0) target = $region37
    $region36: #{rbf_module_forward.1} parent=1 // pred_region
      %s667 = ssub.s32 128, 128
      %668 = vsyncadd [#allocation5], %s667
      %s670 = sshll.u32 [#allocation7], 4
      %s671 = int_to_ptr.vmem [resolvable:$true] %s670
      %673 = dma.vmem_to_hbm [thread:$0]  %s671, 128, %s7, [#allocation5]
    $region37: #{rbf_module_forward.1} parent=1 // pred_fallthru
      _
    // Predicated region
    $region38: #{rbf_module_forward.1} parent=1 // pred_check
      _
    $region39: #{rbf_module_forward.1} parent=1 // pred_check_branch
      %675 = sbr.rel (0) target = $region41
    $region40: #{rbf_module_forward.1} parent=1 // pred_region
      %676 = dma.done [#allocation5], 128
    $region41: #{rbf_module_forward.1} parent=1 // pred_fallthru
      _
    %677 = vsyncpa [#allocation5], 1
    %678 = vsyncpa [#allocation6], 1

</llo_original>
